<compile_context>
chip_gen: v6e
topology: v6e:2x2x1
jax: 0.10.0
libtpu: 0.0.40
codegen_flags: <defaults>
</compile_context>

<pallas_src>
import functools

import jax
import jax.numpy as jnp
from jax.experimental import pallas as pl
from jax.experimental.pallas import tpu as pltpu

LANE = 128


def _round_up(n, m):
    return (n + m - 1) // m * m


def mlp_kernel(x_ref, w1_ref, b1_ref, w2_ref, b2_ref, o_ref):
    # fc1: (TB, D) @ (D, Hp) -> f32 acc, + bias, ReLU.   Hp = lane-padded hidden.
    h = jnp.dot(x_ref[...], w1_ref[...], preferred_element_type=jnp.float32)
    h = jnp.maximum(h + b1_ref[...], 0.0)
    # fc2: (TB, Hp) @ (Hp, Op) -> f32 acc, + bias.        Op = lane-padded output.
    o = jnp.dot(h.astype(w2_ref.dtype), w2_ref[...],
                preferred_element_type=jnp.float32)
    o_ref[...] = (o + b2_ref[...]).astype(o_ref.dtype)


def prepare_params(w1, b1, w2, b2, *, compute_dtype=jnp.bfloat16):
    """One-time parameter preprocessing (keep OUT of the per-call hot path).

    w1: (D, H), b1: (H,) or (1, H), w2: (H, O), b2: (O,) or (1, O)
    (weights stored pre-transposed relative to PyTorch, i.e. (in, out)).

    Pads H and O up to multiples of 128 (mathematically exact: padded columns /
    rows are zero and ReLU(0)=0), reshapes biases to (1, n) f32, and casts the
    weight matrices to `compute_dtype` (bf16 by default; f32 accumulation is
    done in-kernel).
    """
    D, H = w1.shape
    O = w2.shape[1]
    Hp = _round_up(H, LANE)
    Op = _round_up(O, LANE)

    w1 = jnp.asarray(w1, jnp.float32)
    w2 = jnp.asarray(w2, jnp.float32)
    b1 = jnp.asarray(b1, jnp.float32).reshape(1, H)
    b2 = jnp.asarray(b2, jnp.float32).reshape(1, O)

    if Hp != H:
        w1 = jnp.pad(w1, ((0, 0), (0, Hp - H)))
        b1 = jnp.pad(b1, ((0, 0), (0, Hp - H)))
        w2 = jnp.pad(w2, ((0, Hp - H), (0, 0)))
    if Op != O:
        w2 = jnp.pad(w2, ((0, 0), (0, Op - O)))
        b2 = jnp.pad(b2, ((0, 0), (0, Op - O)))

    return {
        "w1": w1.astype(compute_dtype),   # (D, Hp)
        "b1": b1,                         # (1, Hp) f32
        "w2": w2.astype(compute_dtype),   # (Hp, Op)
        "b2": b2,                         # (1, Op) f32
        "out_dim": O,
    }


def disease_classifier_forward(x, params, *, block_b=2048):
    """fc1 -> ReLU -> fc2 forward.  x: (B, D) f32, params from prepare_params."""
    w1, b1, w2, b2 = params["w1"], params["b1"], params["w2"], params["b2"]
    O = params["out_dim"]
    B, D = x.shape
    Dw, Hp = w1.shape
    Op = w2.shape[1]
    assert D == Dw, f"input dim {D} != weight dim {Dw}"

    # Stream activations in the weights' compute dtype (halves x HBM traffic).
    x = x.astype(w1.dtype)

    # Batch tile: multiple of 8, as large as possible (few grid steps), and it
    # always divides the padded batch Bp.
    block_b = max(8, _round_up(block_b, 8))
    TB = min(block_b, _round_up(B, 8))
    Bp = _round_up(B, TB)
    if Bp != B:
        x = jnp.pad(x, ((0, Bp - B), (0, 0)))
    grid = (pl.cdiv(Bp, TB),)

    bytes_accessed = (
        Bp * D * x.dtype.itemsize
        + w1.size * w1.dtype.itemsize + w2.size * w2.dtype.itemsize
        + b1.size * 4 + b2.size * 4
        + Bp * Op * 4
    )
    cost = pl.CostEstimate(
        flops=2 * Bp * (D * Hp + Hp * Op),
        transcendentals=0,
        bytes_accessed=bytes_accessed,
    )

    out = pl.pallas_call(
        mlp_kernel,
        out_shape=jax.ShapeDtypeStruct((Bp, Op), jnp.float32),
        grid=grid,
        in_specs=[
            pl.BlockSpec((TB, D), lambda i: (i, 0)),   # activations: streamed per batch tile
            pl.BlockSpec((D, Hp), lambda i: (0, 0)),   # weights/biases: VMEM-resident
            pl.BlockSpec((1, Hp), lambda i: (0, 0)),
            pl.BlockSpec((Hp, Op), lambda i: (0, 0)),
            pl.BlockSpec((1, Op), lambda i: (0, 0)),
        ],
        out_specs=pl.BlockSpec((TB, Op), lambda i: (i, 0)),   # lane-dense (TB, 128) store
        compiler_params=pltpu.CompilerParams(
            dimension_semantics=("parallel",),
        ),
        cost_estimate=cost,
    )(x, w1, b1, w2, b2)

    out = out[:, :O]
    if Bp != B:
        out = out[:B]
    return out


def init_params(key, input_dim, hidden_dim, output_dim):
    """Deterministic init mimicking nn.Linear default U[-1/sqrt(fan_in), +1/sqrt(fan_in)]."""
    k1, k2, k3, k4 = jax.random.split(key, 4)
    bound1 = 1.0 / jnp.sqrt(jnp.float32(input_dim))
    bound2 = 1.0 / jnp.sqrt(jnp.float32(hidden_dim))
    # Stored pre-transposed relative to PyTorch: (in, out)
    w1 = jax.random.uniform(k1, (input_dim, hidden_dim), jnp.float32, -bound1, bound1)
    b1 = jax.random.uniform(k2, (1, hidden_dim), jnp.float32, -bound1, bound1)
    w2 = jax.random.uniform(k3, (hidden_dim, output_dim), jnp.float32, -bound2, bound2)
    b2 = jax.random.uniform(k4, (1, output_dim), jnp.float32, -bound2, bound2)
    return w1, b1, w2, b2


def _ref_forward_matched(x, params):
    """Reference that matches the kernel's bf16 quantization points, f32 math."""
    cd = params["w1"].dtype
    w1 = params["w1"].astype(jnp.float32)
    w2 = params["w2"].astype(jnp.float32)
    b1, b2 = params["b1"], params["b2"]
    xq = x.astype(cd).astype(jnp.float32)
    h = jnp.maximum(
        jnp.dot(xq, w1, precision=jax.lax.Precision.HIGHEST) + b1, 0.0)
    hq = h.astype(cd).astype(jnp.float32)
    o = jnp.dot(hq, w2, precision=jax.lax.Precision.HIGHEST) + b2
    return o[:, :params["out_dim"]]


if __name__ == "__main__":
    # Breast-cancer style tabular input: 30 features, hidden_dim=64, 2 classes.
    batch, input_dim, hidden_dim, output_dim = 8, 30, 64, 2

    key = jax.random.PRNGKey(0)
    kx, kp, kxb, kxr = jax.random.split(key, 4)
    x = jax.random.normal(kx, (batch, input_dim), jnp.float32)
    w1, b1, w2, b2 = init_params(kp, input_dim, hidden_dim, output_dim)

    # One-time parameter prep (padding / bf16 cast hoisted off the hot path).
    params = prepare_params(w1, b1, w2, b2)

    # --- Small-batch check (single grid step). ---
    out = jax.block_until_ready(disease_classifier_forward(x, params))
    assert out.shape == (batch, output_dim)
    ref = _ref_forward_matched(x, params)
    assert jnp.allclose(out, ref, atol=2e-3, rtol=2e-3)
    # Loose sanity check against the pure-f32 PyTorch-equivalent math (bf16 weights).
    ref_f32 = jnp.maximum(x @ w1 + b1, 0.0) @ w2 + b2
    assert jnp.allclose(out, ref_f32, atol=5e-2, rtol=5e-2)

    # --- Larger batch, forced multi-tile (grid=(4,), TB=128): exercises the
    #     weights-pinned, double-buffered activation pipeline. ---
    big_batch = 512
    xb = jax.random.normal(kxb, (big_batch, input_dim), jnp.float32)
    outb = jax.block_until_ready(disease_classifier_forward(xb, params, block_b=128))
    assert outb.shape == (big_batch, output_dim)
    assert jnp.allclose(outb, _ref_forward_matched(xb, params), atol=2e-3, rtol=2e-3)

    # --- Ragged batch (not a multiple of the tile): pad + slice path. ---
    ragged = 50
    xr = jax.random.normal(kxr, (ragged, input_dim), jnp.float32)
    outr = jax.block_until_ready(disease_classifier_forward(xr, params, block_b=16))
    assert outr.shape == (ragged, output_dim)
    assert jnp.allclose(outr, _ref_forward_matched(xr, params), atol=2e-3, rtol=2e-3)

    print("KERNEL_OK")
</pallas_src>

<mosaic_0001>
module attributes {stable_mosaic.version = 11 : i64} {
  func.func @mlp_kernel(%arg0: i32, %arg1: memref<8x30xbf16, #tpu.memory_space<vmem>>, %arg2: memref<30x128xbf16, #tpu.memory_space<vmem>>, %arg3: memref<1x128xf32, #tpu.memory_space<vmem>>, %arg4: memref<128x128xbf16, #tpu.memory_space<vmem>>, %arg5: memref<1x128xf32, #tpu.memory_space<vmem>>, %arg6: memref<8x128xf32, #tpu.memory_space<vmem>>) attributes {dimension_semantics = [#tpu.dimension_semantics<parallel>], iteration_bounds = array<i64: 1>, scalar_prefetch = 0 : i64, scratch_operands = 0 : i64, tpu.core_type = #tpu.core_type<tc>, window_params = [{transform_indices = @transform_0, window_bounds = array<i64: 8, 30>}, {pipeline_mode = #tpu.pipeline_mode<synchronous>, transform_indices = @transform_1, window_bounds = array<i64: 30, 128>}, {pipeline_mode = #tpu.pipeline_mode<synchronous>, transform_indices = @transform_2, window_bounds = array<i64: 1, 128>}, {pipeline_mode = #tpu.pipeline_mode<synchronous>, transform_indices = @transform_3, window_bounds = array<i64: 128, 128>}, {pipeline_mode = #tpu.pipeline_mode<synchronous>, transform_indices = @transform_4, window_bounds = array<i64: 1, 128>}, {transform_indices = @transform_5, window_bounds = array<i64: 8, 128>}]} {
    %c0 = arith.constant 0 : index
    %c0_0 = arith.constant 0 : index
    %0 = vector.load %arg1[%c0, %c0_0] : memref<8x30xbf16, #tpu.memory_space<vmem>>, vector<8x30xbf16>
    %c0_1 = arith.constant 0 : index
    %c0_2 = arith.constant 0 : index
    %1 = vector.load %arg2[%c0_1, %c0_2] : memref<30x128xbf16, #tpu.memory_space<vmem>>, vector<30x128xbf16>
    %cst = arith.constant dense<0.000000e+00> : vector<8x128xf32>
    %2 = tpu.matmul %0, %1, %cst {dimension_numbers = #tpu.dot_dimension_numbers<[1], [0], [0], [1], [0, 0, 1, 1], [], []>} : vector<8x30xbf16>, vector<30x128xbf16>, vector<8x128xf32> -> vector<8x128xf32>
    %c0_3 = arith.constant 0 : index
    %c0_4 = arith.constant 0 : index
    %3 = vector.load %arg3[%c0_3, %c0_4] : memref<1x128xf32, #tpu.memory_space<vmem>>, vector<1x128xf32>
    %4 = vector.broadcast %3 : vector<1x128xf32> to vector<8x128xf32>
    %5 = arith.addf %2, %4 : vector<8x128xf32>
    %cst_5 = arith.constant 0.000000e+00 : f32
    %6 = vector.broadcast %cst_5 : f32 to vector<8x128xf32>
    %7 = arith.maximumf %5, %6 : vector<8x128xf32>
    %8 = arith.truncf %7 : vector<8x128xf32> to vector<8x128xbf16>
    %c0_6 = arith.constant 0 : index
    %c0_7 = arith.constant 0 : index
    %9 = vector.load %arg4[%c0_6, %c0_7] : memref<128x128xbf16, #tpu.memory_space<vmem>>, vector<128x128xbf16>
    %cst_8 = arith.constant dense<0.000000e+00> : vector<8x128xf32>
    %10 = tpu.matmul %8, %9, %cst_8 {dimension_numbers = #tpu.dot_dimension_numbers<[1], [0], [0], [1], [0, 0, 1, 1], [], []>} : vector<8x128xbf16>, vector<128x128xbf16>, vector<8x128xf32> -> vector<8x128xf32>
    %c0_9 = arith.constant 0 : index
    %c0_10 = arith.constant 0 : index
    %11 = vector.load %arg5[%c0_9, %c0_10] : memref<1x128xf32, #tpu.memory_space<vmem>>, vector<1x128xf32>
    %12 = vector.broadcast %11 : vector<1x128xf32> to vector<8x128xf32>
    %13 = arith.addf %10, %12 : vector<8x128xf32>
    %c0_11 = arith.constant 0 : index
    %c0_12 = arith.constant 0 : index
    %14 = vector.load %arg6[%c0_11, %c0_12] : memref<8x128xf32, #tpu.memory_space<vmem>>, vector<8x128xf32>
    tpu.vector_store %arg6[%c0_11, %c0_12], %13 {strides = array<i32>} : memref<8x128xf32, #tpu.memory_space<vmem>>, vector<8x128xf32>,
    return
  }
  func.func @transform_0(%arg0: i32) -> (i32, i32) {
    %c0_i32 = arith.constant 0 : i32
    %c0_i32_0 = arith.constant 0 : i32
    return %arg0, %c0_i32 : i32, i32
  }
  func.func @transform_1(%arg0: i32) -> (i32, i32) {
    %c0_i32 = arith.constant 0 : i32
    %c0_i32_0 = arith.constant 0 : i32
    %c0_i32_1 = arith.constant 0 : i32
    return %c0_i32, %c0_i32_0 : i32, i32
  }
  func.func @transform_2(%arg0: i32) -> (i32, i32) {
    %c0_i32 = arith.constant 0 : i32
    %c0_i32_0 = arith.constant 0 : i32
    %c0_i32_1 = arith.constant 0 : i32
    return %c0_i32, %c0_i32_0 : i32, i32
  }
  func.func @transform_3(%arg0: i32) -> (i32, i32) {
    %c0_i32 = arith.constant 0 : i32
    %c0_i32_0 = arith.constant 0 : i32
    %c0_i32_1 = arith.constant 0 : i32
    return %c0_i32, %c0_i32_0 : i32, i32
  }
  func.func @transform_4(%arg0: i32) -> (i32, i32) {
    %c0_i32 = arith.constant 0 : i32
    %c0_i32_0 = arith.constant 0 : i32
    %c0_i32_1 = arith.constant 0 : i32
    return %c0_i32, %c0_i32_0 : i32, i32
  }
  func.func @transform_5(%arg0: i32) -> (i32, i32) {
    %c0_i32 = arith.constant 0 : i32
    %c0_i32_0 = arith.constant 0 : i32
    return %arg0, %c0_i32 : i32, i32
  }
}

</mosaic_0001>

<llo_original>
// kernel: tpu_custom_call.1
$region0: #{tpu_custom_call.1}
  #allocation0 [shape = 'u32[]', space=smem, size = 0x4, offset = 0x4, fixed_abs, tag = 'smem constant byte address 0x4 - core index']
  #allocation1 [shape = 'u32[144,128]{1,0:T(1,128)}', space=vmem, size = 0x12000, scoped, tag = 'internal scratch']
  %s0 = inlined_call_operand.hbm [shape: bf16[8,30], index: 0, kind: input, shape index: {}]
  %s1 = inlined_call_operand.hbm [shape: bf16[30,128], index: 1, kind: input, shape index: {}]
  %s2 = inlined_call_operand.vmem [shape: f32[1,128], index: 2, kind: input, shape index: {}]
  %s3 = inlined_call_operand.hbm [shape: bf16[128,128], index: 3, kind: input, shape index: {}]
  %s4 = inlined_call_operand.vmem [shape: f32[1,128], index: 4, kind: input, shape index: {}]
  %s5 = inlined_call_operand.hbm [shape: f32[8,128], index: 5, kind: output, shape index: {}]
  %s6 = sld [smem:[#allocation0]]
  $region42: #{tpu_custom_call.1} parent=0
    _
  %s8 = ssub.s32 1, %s6
  %s9 = scalar_select 0, %s8, %s6
  $region1: #{tpu_custom_call.1} parent=0
    #allocation2 [shape = 'u8[2048]{0}', space=vmem, size = 0x800, scoped, tag = 'input window, operand 0, single buffered']
    #allocation3 [shape = 's32[1]{0}', space=sflag, size = 0x4, scoped, tag = 'scoped memory for tpu_custom_call.1']
    #allocation4 [shape = 's32[1]{0}', space=sflag, size = 0x4, scoped, tag = 'scoped memory for tpu_custom_call.1']
    #allocation5 [shape = 'u8[8192]{0}', space=vmem, size = 0x2000, scoped, tag = 'input window, operand 1, single buffered']
    #allocation6 [shape = 's32[1]{0}', space=sflag, size = 0x4, scoped, tag = 'scoped memory for tpu_custom_call.1']
    #allocation7 [shape = 'u8[32768]{0}', space=vmem, size = 0x8000, scoped, tag = 'input window, operand 3, single buffered']
    #allocation8 [shape = 'u8[4096]{0}', space=vmem, size = 0x1000, scoped, tag = 'output window, operand 0, single buffered']
    %10 = vsyncpa [#allocation3], 0
    %11 = vsyncpa [#allocation6], 0
    %12 = vsyncpa [#allocation4], 0
    // Predicated region
    $region2: #{tpu_custom_call.1} parent=1 // pred_check
      _
    $region3: #{tpu_custom_call.1} parent=1 // pred_check_branch
      %14 = sbr.rel (0) target = $region5
    $region4: #{tpu_custom_call.1} parent=1 // pred_region
      %s16 = ssub.s32 64, 64
      %17 = vsyncadd [#allocation3], %s16
      %s19 = sshll.u32 [#allocation2], 4
      %s20 = int_to_ptr.vmem [resolvable:$true] %s19
      %22 = dma.hbm_to_vmem [thread:$0]  %s0, 64, %s20, [#allocation3]
    $region5: #{tpu_custom_call.1} parent=1 // pred_fallthru
      _
    // Predicated region
    $region6: #{tpu_custom_call.1} parent=1 // pred_check
      _
    $region7: #{tpu_custom_call.1} parent=1 // pred_check_branch
      %24 = sbr.rel (0) target = $region9
    $region8: #{tpu_custom_call.1} parent=1 // pred_region
      %s26 = ssub.s32 256, 256
      %27 = vsyncadd [#allocation6], %s26
      %s28 = sshll.u32 [#allocation5], 4
      %s29 = int_to_ptr.vmem [resolvable:$true] %s28
      %34 = dma.hbm_to_vmem [thread:$0]  %s1, 256, %s29, [#allocation6], 64, 64, 4
    $region9: #{tpu_custom_call.1} parent=1 // pred_fallthru
      _
    // Predicated region
    $region10: #{tpu_custom_call.1} parent=1 // pred_check
      _
    $region11: #{tpu_custom_call.1} parent=1 // pred_check_branch
      %36 = sbr.rel (0) target = $region13
    $region12: #{tpu_custom_call.1} parent=1 // pred_region
      _
    $region13: #{tpu_custom_call.1} parent=1 // pred_fallthru
      _
    // Predicated region
    $region14: #{tpu_custom_call.1} parent=1 // pred_check
      _
    $region15: #{tpu_custom_call.1} parent=1 // pred_check_branch
      %38 = sbr.rel (0) target = $region17
    $region16: #{tpu_custom_call.1} parent=1 // pred_region
      %s40 = ssub.s32 1024, 1024
      %41 = vsyncadd [#allocation6], %s40
      %s42 = sshll.u32 [#allocation7], 4
      %s43 = int_to_ptr.vmem [resolvable:$true] %s42
      %48 = dma.hbm_to_vmem [thread:$0]  %s3, 1024, %s43, [#allocation6], 64, 64, 4
    $region17: #{tpu_custom_call.1} parent=1 // pred_fallthru
      _
    // Predicated region
    $region18: #{tpu_custom_call.1} parent=1 // pred_check
      _
    $region19: #{tpu_custom_call.1} parent=1 // pred_check_branch
      %50 = sbr.rel (0) target = $region21
    $region20: #{tpu_custom_call.1} parent=1 // pred_region
      _
    $region21: #{tpu_custom_call.1} parent=1 // pred_fallthru
      _
    // Predicated region
    $region22: #{tpu_custom_call.1} parent=1 // pred_check
      _
    $region23: #{tpu_custom_call.1} parent=1 // pred_check_branch
      %52 = sbr.rel (0) target = $region25
    $region24: #{tpu_custom_call.1} parent=1 // pred_region
      %53 = dma.done [#allocation3], 64
    $region25: #{tpu_custom_call.1} parent=1 // pred_fallthru
      _
    // Predicated region
    $region26: #{tpu_custom_call.1} parent=1 // pred_check
      _
    $region27: #{tpu_custom_call.1} parent=1 // pred_check_branch
      %55 = sbr.rel (0) target = $region29
    $region28: #{tpu_custom_call.1} parent=1 // pred_region
      %56 = dma.done [#allocation6], 256
    $region29: #{tpu_custom_call.1} parent=1 // pred_fallthru
      _
    // Predicated region
    $region30: #{tpu_custom_call.1} parent=1 // pred_check
      _
    $region31: #{tpu_custom_call.1} parent=1 // pred_check_branch
      %58 = sbr.rel (0) target = $region33
    $region32: #{tpu_custom_call.1} parent=1 // pred_region
      %59 = dma.done [#allocation6], 1024
    $region33: #{tpu_custom_call.1} parent=1 // pred_fallthru
      _
    %v61 = vld [vmem:[#allocation2] sm:$0xf]
    %v62 = vld [vmem:[#allocation5] sm:$0xf]
    %v63 = vld [vmem:[#allocation5 + $0x4] sm:$0xf]
    %v64 = vld [vmem:[#allocation5 + $0x8] sm:$0xf]
    %v65 = vld [vmem:[#allocation5 + $0xc] sm:$0x7]
    %v66 = vld [vmem:[%s2] sm:$0x1]
    %v68 = vlaneseq
    %v69 = vshrl.u32 %v68, 7
    %v70 = vsub.s32 0, %v69
    %v71 = vrot.slane %v66, %v70
    %v77 = vunpack.c.l.b16 %v62
    %v78 = vunpack.c.l.b16 %v63
    %v79 = vunpack.c.l.b16 %v64
    %v80 = vunpack.c.l.b16 %v65
    %v81 = vpack.c.b16 %v78, %v77
    %v82 = vpack.c.b16 %v80, %v79
    %vm84 = vcmask 244736
    %v86 = vsel %vm84, %v61, 0
    %vm88 = vcmask 1046528
    %v90 = vsel %vm88, %v82, 0
    %92 = vmatprep.subr.bf16.mxu0 0
    %93 = vmatpush1.bf16.msra.mxu0 0
    %94 = vmatprep.subr.bf16.mxu0 0
    %95 = vmatpush1.bf16.msra.mxu0 0
    %96 = vmatprep.subr.bf16.mxu0 0
    %97 = vmatpush1.bf16.msra.mxu0 0
    %98 = vmatprep.subr.bf16.mxu0 0
    %99 = vmatpush1.bf16.msra.mxu0 0
    %100 = vmatprep.subr.bf16.mxu0 0
    %101 = vmatpush1.bf16.msra.mxu0 0
    %102 = vmatprep.subr.bf16.mxu0 0
    %103 = vmatpush1.bf16.msra.mxu0 0
    %104 = vmatprep.subr.bf16.mxu0 0
    %105 = vmatpush1.bf16.msra.mxu0 %v90
    %106 = vmatprep.subr.bf16.mxu0 0
    %107 = vmatpush1.bf16.msra.mxu0 %v81
    %108 = vmatprep.subr.bf16.mxu0 0
    %109 = vmatpush2.bf16.msra.mxu0 0
    %110 = vmatprep.subr.bf16.mxu0 0
    %111 = vmatpush2.bf16.msra.mxu0 0
    %112 = vmatprep.subr.bf16.mxu0 0
    %113 = vmatpush2.bf16.msra.mxu0 0
    %114 = vmatprep.subr.bf16.mxu0 0
    %115 = vmatpush2.bf16.msra.mxu0 0
    %116 = vmatprep.subr.bf16.mxu0 0
    %117 = vmatpush2.bf16.msra.mxu0 0
    %118 = vmatprep.subr.bf16.mxu0 0
    %119 = vmatpush2.bf16.msra.mxu0 0
    %120 = vmatprep.subr.bf16.mxu0 0
    %121 = vmatpush2.bf16.msra.mxu0 0
    %122 = vmatprep.subr.bf16.mxu0 0
    %123 = vmatpush2.bf16.msra.mxu0 0
    %124 = vmatprep.mubr.bf16.mxu0 0
    %125 = vmatmul.mubr.bf16.gmra.mxu0 %v86
    %v126 = vpop.f32.mrf.mxu0
    %v127 = vadd.f32 %v71, %v126
    %v128 = vpop.f32.mrf.mxu0
    %v129 = vpop.f32.mrf.mxu0
    %v130 = vpop.f32.mrf.mxu0
    %131 = vdwg.mxu0
    %v132 = vmax.f32 %v127, 0.0
    %v133 = vpack.c.bf16 %v132, %v132
    %v134 = vld [vmem:[#allocation7] sm:$0xf]
    %v135 = vld [vmem:[#allocation7 + $0x4] sm:$0xf]
    %v136 = vld [vmem:[#allocation7 + $0x8] sm:$0xf]
    %v137 = vld [vmem:[#allocation7 + $0xc] sm:$0xf]
    %v138 = vld [vmem:[#allocation7 + $0x10] sm:$0xf]
    %v139 = vld [vmem:[#allocation7 + $0x14] sm:$0xf]
    %v140 = vld [vmem:[#allocation7 + $0x18] sm:$0xf]
    %v141 = vld [vmem:[#allocation7 + $0x1c] sm:$0xf]
    %v142 = vld [vmem:[#allocation7 + $0x20] sm:$0xf]
    %v143 = vld [vmem:[#allocation7 + $0x24] sm:$0xf]
    %v144 = vld [vmem:[#allocation7 + $0x28] sm:$0xf]
    %v145 = vld [vmem:[#allocation7 + $0x2c] sm:$0xf]
    %v146 = vld [vmem:[#allocation7 + $0x30] sm:$0xf]
    %v147 = vld [vmem:[#allocation7 + $0x34] sm:$0xf]
    %v148 = vld [vmem:[#allocation7 + $0x38] sm:$0xf]
    %v149 = vld [vmem:[#allocation7 + $0x3c] sm:$0xf]
    %v150 = vld [vmem:[%s4] sm:$0x1]
    %v152 = vlaneseq
    %v153 = vshrl.u32 %v152, 7
    %v154 = vsub.s32 0, %v153
    %v155 = vrot.slane %v150, %v154
    %v173 = vunpack.c.l.b16 %v134
    %v174 = vunpack.c.l.b16 %v135
    %v175 = vunpack.c.l.b16 %v136
    %v176 = vunpack.c.l.b16 %v137
    %v177 = vunpack.c.l.b16 %v138
    %v178 = vunpack.c.l.b16 %v139
    %v179 = vunpack.c.l.b16 %v140
    %v180 = vunpack.c.l.b16 %v141
    %v181 = vunpack.c.l.b16 %v142
    %v182 = vunpack.c.l.b16 %v143
    %v183 = vunpack.c.l.b16 %v144
    %v184 = vunpack.c.l.b16 %v145
    %v185 = vunpack.c.l.b16 %v146
    %v186 = vunpack.c.l.b16 %v147
    %v187 = vunpack.c.l.b16 %v148
    %v188 = vunpack.c.l.b16 %v149
    %v189 = vpack.c.b16 %v174, %v173
    %v190 = vpack.c.b16 %v176, %v175
    %v191 = vpack.c.b16 %v178, %v177
    %v192 = vpack.c.b16 %v180, %v179
    %v193 = vpack.c.b16 %v182, %v181
    %v194 = vpack.c.b16 %v184, %v183
    %v195 = vpack.c.b16 %v186, %v185
    %v196 = vpack.c.b16 %v188, %v187
    %205 = vmatprep.subr.bf16.mxu0 0
    %206 = vmatpush1.bf16.msra.mxu0 %v196
    %207 = vmatprep.subr.bf16.mxu0 0
    %208 = vmatpush1.bf16.msra.mxu0 %v195
    %209 = vmatprep.subr.bf16.mxu0 0
    %210 = vmatpush1.bf16.msra.mxu0 %v194
    %211 = vmatprep.subr.bf16.mxu0 0
    %212 = vmatpush1.bf16.msra.mxu0 %v193
    %213 = vmatprep.subr.bf16.mxu0 0
    %214 = vmatpush1.bf16.msra.mxu0 %v192
    %215 = vmatprep.subr.bf16.mxu0 0
    %216 = vmatpush1.bf16.msra.mxu0 %v191
    %217 = vmatprep.subr.bf16.mxu0 0
    %218 = vmatpush1.bf16.msra.mxu0 %v190
    %219 = vmatprep.subr.bf16.mxu0 0
    %220 = vmatpush1.bf16.msra.mxu0 %v189
    %221 = vmatprep.subr.bf16.mxu0 0
    %222 = vmatpush2.bf16.msra.mxu0 0
    %223 = vmatprep.subr.bf16.mxu0 0
    %224 = vmatpush2.bf16.msra.mxu0 0
    %225 = vmatprep.subr.bf16.mxu0 0
    %226 = vmatpush2.bf16.msra.mxu0 0
    %227 = vmatprep.subr.bf16.mxu0 0
    %228 = vmatpush2.bf16.msra.mxu0 0
    %229 = vmatprep.subr.bf16.mxu0 0
    %230 = vmatpush2.bf16.msra.mxu0 0
    %231 = vmatprep.subr.bf16.mxu0 0
    %232 = vmatpush2.bf16.msra.mxu0 0
    %233 = vmatprep.subr.bf16.mxu0 0
    %234 = vmatpush2.bf16.msra.mxu0 0
    %235 = vmatprep.subr.bf16.mxu0 0
    %236 = vmatpush2.bf16.msra.mxu0 0
    %237 = vmatprep.mubr.bf16.mxu0 0
    %238 = vmatmul.mubr.bf16.gmra.mxu0 %v133
    %v239 = vpop.f32.mrf.mxu0
    %v240 = vadd.f32 %v155, %v239
    %v241 = vpop.f32.mrf.mxu0
    %v242 = vpop.f32.mrf.mxu0
    %v243 = vpop.f32.mrf.mxu0
    %244 = vdwg.mxu0
    %245 = vst [vmem:[#allocation8] sm:$0xff] %v240
    // Predicated region
    $region34: #{tpu_custom_call.1} parent=1 // pred_check
      _
    $region35: #{tpu_custom_call.1} parent=1 // pred_check_branch
      %247 = sbr.rel (0) target = $region37
    $region36: #{tpu_custom_call.1} parent=1 // pred_region
      %s249 = ssub.s32 128, 128
      %250 = vsyncadd [#allocation4], %s249
      %s252 = sshll.u32 [#allocation8], 4
      %s253 = int_to_ptr.vmem [resolvable:$true] %s252
      %255 = dma.vmem_to_hbm [thread:$0]  %s253, 128, %s5, [#allocation4]
    $region37: #{tpu_custom_call.1} parent=1 // pred_fallthru
      _
    // Predicated region
    $region38: #{tpu_custom_call.1} parent=1 // pred_check
      _
    $region39: #{tpu_custom_call.1} parent=1 // pred_check_branch
      %257 = sbr.rel (0) target = $region41
    $region40: #{tpu_custom_call.1} parent=1 // pred_region
      %258 = dma.done [#allocation4], 128
    $region41: #{tpu_custom_call.1} parent=1 // pred_fallthru
      _
    %259 = vsyncpa [#allocation3], 1
    %260 = vsyncpa [#allocation6], 1
    %261 = vsyncpa [#allocation4], 1

</llo_original>
